<compile_context>
chip_gen: v6e
topology: v6e:2x2x1
jax: 0.10.0
libtpu: 0.0.40
codegen_flags: <defaults>
</compile_context>

<pallas_src>
import functools

import jax
import jax.numpy as jnp
from jax import lax
from jax.experimental import pallas as pl
from jax.experimental.pallas import tpu as pltpu


def _round_up(a, b):
    return (a + b - 1) // b * b


def _vmem_capacity_bytes():
    """Physical per-core VMEM; conservative fallback = v7x's 64 MiB per TensorCore."""
    try:
        info = pltpu.get_tpu_info()
        cap = getattr(info, "vmem_capacity_bytes", None)
        if cap:
            return int(cap)
    except Exception:
        pass
    return 64 * 1024 * 1024


def _pick_tk(K, max_tk):
    """Largest 128-multiple divisor of K not exceeding max_tk (K itself if none).

    Returning a divisor keeps the reduction axis un-ragged, which is required for
    correctness (ragged K would accumulate garbage into valid output rows).
    """
    if K <= max_tk:
        return K
    best = None
    d = 128
    while d <= max_tk:
        if K % d == 0:
            best = d
        d += 128
    return best if best is not None else K


# --------------------------------------------------------------------------- kernels

def _resident_kernel(x_ref, w_ref, b_ref, o_ref, *, compute_dtype):
    # One (tm, K) x (N, K)^T MXU matmul per grid step; W and b stay resident in VMEM.
    x = x_ref[...].astype(compute_dtype)           # in-VMEM cast (no HBM pass over x)
    w = w_ref[...].astype(compute_dtype)           # no-op: pre-cast in the wrapper
    acc = lax.dot_general(x, w, (((1,), (1,)), ((), ())),
                          preferred_element_type=jnp.float32)
    o_ref[...] = (acc + b_ref[...].astype(jnp.float32)).astype(o_ref.dtype)


def _tiled_kernel(x_ref, w_ref, b_ref, o_ref, acc_ref, *, compute_dtype):
    # 3-D grid (outer, inner, k); k is last/"arbitrary" with an f32 accumulator.
    k = pl.program_id(2)

    @pl.when(k == 0)
    def _():
        acc_ref[...] = jnp.zeros_like(acc_ref)

    x = x_ref[...].astype(compute_dtype)
    w = w_ref[...].astype(compute_dtype)
    acc_ref[...] += lax.dot_general(x, w, (((1,), (1,)), ((), ())),
                                    preferred_element_type=jnp.float32)

    @pl.when(k == pl.num_programs(2) - 1)
    def _():
        o_ref[...] = (acc_ref[...] + b_ref[...].astype(jnp.float32)).astype(o_ref.dtype)


# --------------------------------------------------------------------------- wrapper

def linear_projection(
    x,
    weight,
    bias,
    *,
    tm=512,
    tn=512,
    max_tk=2048,
    compute_dtype=jnp.bfloat16,   # bf16 streaming + f32 accumulation by default
):
    """x: (B, P, patch_dim); weight: (dim, patch_dim) [PyTorch layout]; bias: (dim,)."""
    B, P, K = x.shape
    N, Kw = weight.shape
    assert Kw == K, "weight must be (dim, patch_dim)"
    M = B * P
    out_dtype = x.dtype

    cdt = jnp.dtype(compute_dtype) if compute_dtype is not None else jnp.dtype(x.dtype)

    # Flattened 2-D view of the activations -- metadata only, no HBM pass.
    x2d = x.reshape(M, K)

    # Stream W in the compute dtype (constant-folded under jit for static params);
    # keep the bias in f32 since the add/accumulation stays f32 on all gens.
    w = weight if weight.dtype == cdt else weight.astype(cdt)
    b = bias.astype(jnp.float32)

    # Pad the output-lane dim N to a 128 multiple only when needed (lane-dense stores).
    N_pad = _round_up(N, 128)
    if N_pad != N:
        w = jnp.pad(w, ((0, N_pad - N), (0, 0)))
        b = jnp.pad(b, (0, N_pad - N))
    b2d = b.reshape(1, N_pad)

    x_is = jnp.dtype(x2d.dtype).itemsize
    w_is = jnp.dtype(w.dtype).itemsize
    o_is = jnp.dtype(out_dtype).itemsize

    # M tiling: large MXU-friendly row tiles; ragged last tile handled by the
    # cdiv grid + Pallas edge masking (no wrapper-side pad over x, waste <= 1 tile).
    tm_eff = min(tm, _round_up(M, 8))
    m_tiles = pl.cdiv(M, tm_eff)

    # Generation-aware VMEM budget: 64 MiB/TC on v7x, 128 MiB on v5e/v6e.
    vmem_cap = _vmem_capacity_bytes()
    vmem_limit = min(int(0.75 * vmem_cap), 100 * 1024 * 1024)   # 48 MiB v7x, 96 MiB v5e/v6e
    budget = int(0.85 * vmem_limit)                             # headroom for pipeline slack

    # Resident-path VMEM use: W/b single-buffered, x/out tiles double-buffered.
    resident_vmem = (N_pad * K * w_is
                     + 8 * N_pad * 4
                     + 2 * tm_eff * K * x_is
                     + 2 * tm_eff * N_pad * o_is)

    if resident_vmem <= budget:
        # ---------------- resident fast path: 1-D grid over row tiles ----------------
        cost = pl.CostEstimate(
            flops=2 * M * N_pad * K,
            transcendentals=0,
            bytes_accessed=M * K * x_is + N_pad * K * w_is + N_pad * 4 + M * N_pad * o_is,
        )
        y2d = pl.pallas_call(
            functools.partial(_resident_kernel, compute_dtype=cdt),
            out_shape=jax.ShapeDtypeStruct((M, N_pad), out_dtype),
            grid_spec=pltpu.PrefetchScalarGridSpec(
                num_scalar_prefetch=0,
                grid=(m_tiles,),
                in_specs=[
                    pl.BlockSpec((tm_eff, K), lambda i: (i, 0)),            # streamed rows
                    pl.BlockSpec((N_pad, K), lambda i: (0, 0),
                                 pipeline_mode=pl.Buffered(1)),             # resident W
                    pl.BlockSpec((1, N_pad), lambda i: (0, 0),
                                 pipeline_mode=pl.Buffered(1)),             # resident bias
                ],
                out_specs=pl.BlockSpec((tm_eff, N_pad), lambda i: (i, 0)),
            ),
            compiler_params=pltpu.CompilerParams(
                dimension_semantics=("parallel",),
                vmem_limit_bytes=vmem_limit,
            ),
            cost_estimate=cost,
        )(x2d, w, b2d)
    else:
        # ---------------- tiled fallback: (outer, inner, k) grid ----------------
        tn_eff = min(tn, N_pad)

        def fits(tm_, tn_, tk_):
            return (2 * tm_ * tk_ * x_is          # x tile (double-buffered)
                    + 2 * tn_ * tk_ * w_is        # W tile (double-buffered)
                    + 2 * 8 * tn_ * 4             # bias tile
                    + 2 * tm_ * tn_ * o_is        # out tile (double-buffered)
                    + tm_ * tn_ * 4               # f32 accumulator scratch
                    ) <= budget

        tk_eff = K if fits(tm_eff, tn_eff, K) else _pick_tk(K, max_tk)
        while not fits(tm_eff, tn_eff, tk_eff) and tm_eff > 8:
            tm_eff = max(8, _round_up(tm_eff // 2, 8))
        m_tiles = pl.cdiv(M, tm_eff)
        n_tiles = pl.cdiv(N_pad, tn_eff)
        k_tiles = K // tk_eff                     # _pick_tk guarantees divisibility

        # Grid order: re-stream whichever operand costs less (only matters for k_tiles==1,
        # where the non-inner operand is read exactly once).
        w_restream = m_tiles * N_pad * K * w_is
        x_restream = n_tiles * M * K * x_is
        m_outer = w_restream <= x_restream

        if m_outer:
            grid = (m_tiles, n_tiles, k_tiles)
            x_map = lambda i, j, k: (i, k)
            w_map = lambda i, j, k: (j, k)
            b_map = lambda i, j, k: (0, j)
            o_map = lambda i, j, k: (i, j)
        else:
            grid = (n_tiles, m_tiles, k_tiles)
            x_map = lambda j, i, k: (i, k)
            w_map = lambda j, i, k: (j, k)
            b_map = lambda j, i, k: (0, j)
            o_map = lambda j, i, k: (i, j)

        x_bytes = (M * K * x_is) if (k_tiles == 1 and m_outer) else x_restream
        w_bytes = (N_pad * K * w_is) if (k_tiles == 1 and not m_outer) else w_restream
        cost = pl.CostEstimate(
            flops=2 * M * N_pad * K,
            transcendentals=0,
            bytes_accessed=x_bytes + w_bytes + N_pad * 4 + M * N_pad * o_is,
        )
        y2d = pl.pallas_call(
            functools.partial(_tiled_kernel, compute_dtype=cdt),
            out_shape=jax.ShapeDtypeStruct((M, N_pad), out_dtype),
            grid_spec=pltpu.PrefetchScalarGridSpec(
                num_scalar_prefetch=0,
                grid=grid,
                in_specs=[
                    pl.BlockSpec((tm_eff, tk_eff), x_map),
                    pl.BlockSpec((tn_eff, tk_eff), w_map),
                    pl.BlockSpec((1, tn_eff), b_map),
                ],
                out_specs=pl.BlockSpec((tm_eff, tn_eff), o_map),
                scratch_shapes=[pltpu.VMEM((tm_eff, tn_eff), jnp.float32)],
            ),
            compiler_params=pltpu.CompilerParams(
                dimension_semantics=("parallel", "parallel", "arbitrary"),
                vmem_limit_bytes=vmem_limit,
            ),
            cost_estimate=cost,
        )(x2d, w, b2d)

    if N_pad != N:
        y2d = y2d[:, :N]
    return y2d.reshape(B, P, N)


if __name__ == "__main__":
    # Small shapes consistent with the module's forward:
    #   batch=2, n_patches=8, patch_dim=32, dim=128
    batch, n_patches, patch_dim, dim = 2, 8, 32, 128

    key = jax.random.PRNGKey(0)
    kx, kw, kb = jax.random.split(key, 3)

    x = jax.random.normal(kx, (batch, n_patches, patch_dim), dtype=jnp.float32)

    # Deterministic parameter init mimicking nn.Linear: U(-1/sqrt(in), 1/sqrt(in))
    bound = 1.0 / (patch_dim ** 0.5)
    weight = jax.random.uniform(kw, (dim, patch_dim), minval=-bound, maxval=bound,
                                dtype=jnp.float32)
    bias = jax.random.uniform(kb, (dim,), minval=-bound, maxval=bound,
                              dtype=jnp.float32)

    # Reference (same math as PyTorch nn.Linear), highest precision.
    y_ref = jnp.einsum("bpk,nk->bpn", x, weight, precision="highest") + bias

    # Default path: bf16 operand streaming, f32 accumulation (MXU-native).
    y = linear_projection(x, weight, bias)
    y = jax.block_until_ready(y)
    assert y.shape == (batch, n_patches, dim)
    assert y.dtype == x.dtype
    assert jnp.allclose(y, y_ref, atol=3e-2, rtol=3e-2)   # bf16 operand precision

    # Full-f32 compute path for a tight numerical check.
    y_f32 = linear_projection(x, weight, bias, compute_dtype=jnp.float32)
    y_f32 = jax.block_until_ready(y_f32)
    assert jnp.allclose(y_f32, y_ref, atol=5e-5, rtol=5e-5)

    print("KERNEL_OK")
</pallas_src>

<mosaic_0001>
module attributes {stable_mosaic.version = 11 : i64} {
  func.func @_resident_kernel(%arg0: i32, %arg1: memref<16x32xf32, #tpu.memory_space<vmem>>, %arg2: memref<128x32xbf16, #tpu.memory_space<vmem>>, %arg3: memref<1x128xf32, #tpu.memory_space<vmem>>, %arg4: memref<16x128xf32, #tpu.memory_space<vmem>>) attributes {dimension_semantics = [#tpu.dimension_semantics<parallel>], iteration_bounds = array<i64: 1>, scalar_prefetch = 0 : i64, scratch_operands = 0 : i64, tpu.core_type = #tpu.core_type<tc>, window_params = [{transform_indices = @transform_0, window_bounds = array<i64: 16, 32>}, {pipeline_mode = #tpu.pipeline_mode<synchronous>, transform_indices = @transform_1, window_bounds = array<i64: 128, 32>}, {pipeline_mode = #tpu.pipeline_mode<synchronous>, transform_indices = @transform_2, window_bounds = array<i64: 1, 128>}, {transform_indices = @transform_3, window_bounds = array<i64: 16, 128>}]} {
    %c0 = arith.constant 0 : index
    %c0_0 = arith.constant 0 : index
    %0 = vector.load %arg1[%c0, %c0_0] : memref<16x32xf32, #tpu.memory_space<vmem>>, vector<16x32xf32>
    %1 = arith.truncf %0 : vector<16x32xf32> to vector<16x32xbf16>
    %c0_1 = arith.constant 0 : index
    %c0_2 = arith.constant 0 : index
    %2 = vector.load %arg2[%c0_1, %c0_2] : memref<128x32xbf16, #tpu.memory_space<vmem>>, vector<128x32xbf16>
    %cst = arith.constant dense<0.000000e+00> : vector<16x128xf32>
    %3 = tpu.matmul %1, %2, %cst {dimension_numbers = #tpu.dot_dimension_numbers<[1], [1], [0], [0], [0, 0, 1, 0], [], []>} : vector<16x32xbf16>, vector<128x32xbf16>, vector<16x128xf32> -> vector<16x128xf32>
    %c0_3 = arith.constant 0 : index
    %c0_4 = arith.constant 0 : index
    %4 = vector.load %arg3[%c0_3, %c0_4] : memref<1x128xf32, #tpu.memory_space<vmem>>, vector<1x128xf32>
    %5 = vector.broadcast %4 : vector<1x128xf32> to vector<16x128xf32>
    %6 = arith.addf %3, %5 : vector<16x128xf32>
    %c0_5 = arith.constant 0 : index
    %c0_6 = arith.constant 0 : index
    %7 = vector.load %arg4[%c0_5, %c0_6] : memref<16x128xf32, #tpu.memory_space<vmem>>, vector<16x128xf32>
    tpu.vector_store %arg4[%c0_5, %c0_6], %6 {strides = array<i32>} : memref<16x128xf32, #tpu.memory_space<vmem>>, vector<16x128xf32>,
    return
  }
  func.func @transform_0(%arg0: i32) -> (i32, i32) {
    %c0_i32 = arith.constant 0 : i32
    %c0_i32_0 = arith.constant 0 : i32
    return %arg0, %c0_i32 : i32, i32
  }
  func.func @transform_1(%arg0: i32) -> (i32, i32) {
    %c0_i32 = arith.constant 0 : i32
    %c0_i32_0 = arith.constant 0 : i32
    %c0_i32_1 = arith.constant 0 : i32
    return %c0_i32, %c0_i32_0 : i32, i32
  }
  func.func @transform_2(%arg0: i32) -> (i32, i32) {
    %c0_i32 = arith.constant 0 : i32
    %c0_i32_0 = arith.constant 0 : i32
    %c0_i32_1 = arith.constant 0 : i32
    return %c0_i32, %c0_i32_0 : i32, i32
  }
  func.func @transform_3(%arg0: i32) -> (i32, i32) {
    %c0_i32 = arith.constant 0 : i32
    %c0_i32_0 = arith.constant 0 : i32
    return %arg0, %c0_i32 : i32, i32
  }
}

</mosaic_0001>

<llo_original>
// kernel: tpu_custom_call.1
$region0: #{tpu_custom_call.1}
  #allocation0 [shape = 'u32[]', space=smem, size = 0x4, offset = 0x4, fixed_abs, tag = 'smem constant byte address 0x4 - core index']
  #allocation1 [shape = 'u32[144,128]{1,0:T(1,128)}', space=vmem, size = 0x12000, scoped, tag = 'internal scratch']
  %s0 = inlined_call_operand.vmem [shape: f32[16,32], index: 0, kind: input, shape index: {}]
  %s1 = inlined_call_operand.vmem [shape: bf16[128,32], index: 1, kind: input, shape index: {}]
  %s2 = inlined_call_operand.vmem [shape: f32[1,128], index: 2, kind: input, shape index: {}]
  %s3 = inlined_call_operand.hbm [shape: f32[16,128], index: 3, kind: output, shape index: {}]
  %s4 = sld [smem:[#allocation0]]
  $region22: #{tpu_custom_call.1} parent=0
    _
  %s6 = ssub.s32 1, %s4
  %s7 = scalar_select 0, %s6, %s4
  $region1: #{tpu_custom_call.1} parent=0
    #allocation2 [shape = 'u8[8192]{0}', space=vmem, size = 0x2000, scoped, tag = 'output window, operand 0, single buffered']
    #allocation3 [shape = 's32[1]{0}', space=sflag, size = 0x4, scoped, tag = 'scoped memory for tpu_custom_call.1']
    %8 = vsyncpa [#allocation3], 0
    // Predicated region
    $region2: #{tpu_custom_call.1} parent=1 // pred_check
      _
    $region3: #{tpu_custom_call.1} parent=1 // pred_check_branch
      %10 = sbr.rel (0) target = $region5
    $region4: #{tpu_custom_call.1} parent=1 // pred_region
      _
    $region5: #{tpu_custom_call.1} parent=1 // pred_fallthru
      _
    // Predicated region
    $region6: #{tpu_custom_call.1} parent=1 // pred_check
      _
    $region7: #{tpu_custom_call.1} parent=1 // pred_check_branch
      %12 = sbr.rel (0) target = $region9
    $region8: #{tpu_custom_call.1} parent=1 // pred_region
      _
    $region9: #{tpu_custom_call.1} parent=1 // pred_fallthru
      _
    // Predicated region
    $region10: #{tpu_custom_call.1} parent=1 // pred_check
      _
    $region11: #{tpu_custom_call.1} parent=1 // pred_check_branch
      %14 = sbr.rel (0) target = $region13
    $region12: #{tpu_custom_call.1} parent=1 // pred_region
      _
    $region13: #{tpu_custom_call.1} parent=1 // pred_fallthru
      _
    %v16 = vld [vmem:[%s0] sm:$0xff]
    %v17 = vld [vmem:[%s0 + $0x8] sm:$0xff]
    %v18 = vpack.c.bf16 %v17, %v16
    %v19 = vld [vmem:[%s1] sm:$0xf]
    %v20 = vld [vmem:[%s1 + $0x4] sm:$0xf]
    %v21 = vld [vmem:[%s1 + $0x8] sm:$0xf]
    %v22 = vld [vmem:[%s1 + $0xc] sm:$0xf]
    %v23 = vld [vmem:[%s1 + $0x10] sm:$0xf]
    %v24 = vld [vmem:[%s1 + $0x14] sm:$0xf]
    %v25 = vld [vmem:[%s1 + $0x18] sm:$0xf]
    %v26 = vld [vmem:[%s1 + $0x1c] sm:$0xf]
    %v27 = vld [vmem:[%s1 + $0x20] sm:$0xf]
    %v28 = vld [vmem:[%s1 + $0x24] sm:$0xf]
    %v29 = vld [vmem:[%s1 + $0x28] sm:$0xf]
    %v30 = vld [vmem:[%s1 + $0x2c] sm:$0xf]
    %v31 = vld [vmem:[%s1 + $0x30] sm:$0xf]
    %v32 = vld [vmem:[%s1 + $0x34] sm:$0xf]
    %v33 = vld [vmem:[%s1 + $0x38] sm:$0xf]
    %v34 = vld [vmem:[%s1 + $0x3c] sm:$0xf]
    %v35 = vld [vmem:[%s2] sm:$0x1]
    %v37 = vlaneseq
    %v38 = vshrl.u32 %v37, 7
    %v39 = vsub.s32 0, %v38
    %v40 = vrot.slane %v35, %v39
    %v58 = vunpack.c.l.b16 %v19
    %v59 = vunpack.c.l.b16 %v20
    %v60 = vunpack.c.l.b16 %v21
    %v61 = vunpack.c.l.b16 %v22
    %v62 = vunpack.c.l.b16 %v23
    %v63 = vunpack.c.l.b16 %v24
    %v64 = vunpack.c.l.b16 %v25
    %v65 = vunpack.c.l.b16 %v26
    %v66 = vunpack.c.l.b16 %v27
    %v67 = vunpack.c.l.b16 %v28
    %v68 = vunpack.c.l.b16 %v29
    %v69 = vunpack.c.l.b16 %v30
    %v70 = vunpack.c.l.b16 %v31
    %v71 = vunpack.c.l.b16 %v32
    %v72 = vunpack.c.l.b16 %v33
    %v73 = vunpack.c.l.b16 %v34
    %v74 = vpack.c.b16 %v59, %v58
    %v75 = vpack.c.b16 %v61, %v60
    %v76 = vpack.c.b16 %v63, %v62
    %v77 = vpack.c.b16 %v65, %v64
    %v78 = vpack.c.b16 %v67, %v66
    %v79 = vpack.c.b16 %v69, %v68
    %v80 = vpack.c.b16 %v71, %v70
    %v81 = vpack.c.b16 %v73, %v72
    %vm82 = vcmask 261120
    %v84 = vsel %vm82, %v18, 0
    %v87 = vsel %vm82, %v74, 0
    %v90 = vsel %vm82, %v75, 0
    %v93 = vsel %vm82, %v76, 0
    %v96 = vsel %vm82, %v77, 0
    %v99 = vsel %vm82, %v78, 0
    %v102 = vsel %vm82, %v79, 0
    %v105 = vsel %vm82, %v80, 0
    %v108 = vsel %vm82, %v81, 0
    %110 = vmatprep.subr.bf16.mxu0 0
    %111 = vmatpush1.bf16.xpose.msra.mxu0 %v108
    %112 = vmatprep.subr.bf16.mxu0 0
    %113 = vmatpush1.bf16.xpose.msra.mxu0 %v105
    %114 = vmatprep.subr.bf16.mxu0 0
    %115 = vmatpush1.bf16.xpose.msra.mxu0 %v102
    %116 = vmatprep.subr.bf16.mxu0 0
    %117 = vmatpush1.bf16.xpose.msra.mxu0 %v99
    %118 = vmatprep.subr.bf16.mxu0 0
    %119 = vmatpush1.bf16.xpose.msra.mxu0 %v96
    %120 = vmatprep.subr.bf16.mxu0 0
    %121 = vmatpush1.bf16.xpose.msra.mxu0 %v93
    %122 = vmatprep.subr.bf16.mxu0 0
    %123 = vmatpush1.bf16.xpose.msra.mxu0 %v90
    %124 = vmatprep.subr.bf16.mxu0 0
    %125 = vmatpush1.bf16.xpose.msra.mxu0 %v87
    %126 = vmatprep.subr.bf16.mxu0 0
    %127 = vmatpush2.bf16.xpose.msra.mxu0 0
    %128 = vmatprep.subr.bf16.mxu0 0
    %129 = vmatpush2.bf16.xpose.msra.mxu0 0
    %130 = vmatprep.subr.bf16.mxu0 0
    %131 = vmatpush2.bf16.xpose.msra.mxu0 0
    %132 = vmatprep.subr.bf16.mxu0 0
    %133 = vmatpush2.bf16.xpose.msra.mxu0 0
    %134 = vmatprep.subr.bf16.mxu0 0
    %135 = vmatpush2.bf16.xpose.msra.mxu0 0
    %136 = vmatprep.subr.bf16.mxu0 0
    %137 = vmatpush2.bf16.xpose.msra.mxu0 0
    %138 = vmatprep.subr.bf16.mxu0 0
    %139 = vmatpush2.bf16.xpose.msra.mxu0 0
    %140 = vmatprep.subr.bf16.mxu0 0
    %141 = vmatpush2.bf16.xpose.msra.mxu0 0
    %142 = vmatprep.mubr.bf16.mxu0 0
    %143 = vmatmul.mubr.bf16.gmra.mxu0 %v84
    %v144 = vpop.f32.mrf.mxu0
    %v145 = vadd.f32 %v40, %v144
    %v146 = vpop.f32.mrf.mxu0
    %v147 = vpop.f32.mrf.mxu0
    %v148 = vadd.f32 %v40, %v147
    %v149 = vpop.f32.mrf.mxu0
    %150 = vdwg.mxu0
    %151 = vst [vmem:[#allocation2] sm:$0xff] %v145
    %152 = vst [vmem:[#allocation2 + $0x8] sm:$0xff] %v148
    // Predicated region
    $region14: #{tpu_custom_call.1} parent=1 // pred_check
      _
    $region15: #{tpu_custom_call.1} parent=1 // pred_check_branch
      %154 = sbr.rel (0) target = $region17
    $region16: #{tpu_custom_call.1} parent=1 // pred_region
      %s156 = ssub.s32 256, 256
      %157 = vsyncadd [#allocation3], %s156
      %s158 = sshll.u32 [#allocation2], 4
      %s159 = int_to_ptr.vmem [resolvable:$true] %s158
      %164 = dma.vmem_to_hbm [thread:$0]  %s159, 256, %s3, [#allocation3], 128, 128, 8
    $region17: #{tpu_custom_call.1} parent=1 // pred_fallthru
      _
    // Predicated region
    $region18: #{tpu_custom_call.1} parent=1 // pred_check
      _
    $region19: #{tpu_custom_call.1} parent=1 // pred_check_branch
      %166 = sbr.rel (0) target = $region21
    $region20: #{tpu_custom_call.1} parent=1 // pred_region
      %167 = dma.done [#allocation3], 256
    $region21: #{tpu_custom_call.1} parent=1 // pred_fallthru
      _
    %168 = vsyncpa [#allocation3], 1

</llo_original>
